<compile_context>
chip_gen: v5e
topology: v5e:2x2
jax: 0.10.0
libtpu: 0.0.40
codegen_flags: <defaults>
</compile_context>

<pallas_src>
import functools

import jax
import jax.numpy as jnp
from jax.experimental import pallas as pl
from jax.experimental.pallas import tpu as pltpu


def _fused_conv_bn_relu_kernel(p_ref, w_ref, gb_ref, o_ref, *, n_imgs, pix_per_img, eps):
    # p_ref:  (Kp, M)      bf16  im2col-transposed patches, M = N*OH*OW (lane dense),
    #                            Kp = K padded to a multiple of 16 (zero rows).
    # w_ref:  (Cout, Kp)   bf16  reshaped conv weight (zero-padded columns).
    # gb_ref: (Cout, 2)    f32   packed [gamma | beta].
    # o_ref:  (N, Cout, OH*OW) f32  fused conv+BN+ReLU output, NCHW-ordered per image.
    y = jnp.dot(w_ref[...], p_ref[...], preferred_element_type=jnp.float32)   # (Cout, M)
    # NOTE: conv bias intentionally omitted — training-mode BN subtracts the per-channel
    # batch mean, which cancels a constant per-channel bias exactly.

    inv_count = 1.0 / float(n_imgs * pix_per_img)
    s1 = jnp.sum(y, axis=1, keepdims=True)           # (Cout, 1)
    s2 = jnp.sum(y * y, axis=1, keepdims=True)       # (Cout, 1)  one-pass stats
    mean = s1 * inv_count
    var = s2 * inv_count - mean * mean               # biased variance (training-mode BN)

    gamma = gb_ref[:, 0:1]                           # (Cout, 1)
    beta = gb_ref[:, 1:2]                            # (Cout, 1)
    scale = gamma * jax.lax.rsqrt(var + eps)
    shift = beta - mean * scale
    z = jnp.maximum(y * scale + shift, 0.0)          # (Cout, M)

    # NCHW-direct stores: per-image lane-dense (Cout, OH*OW) slabs (lane offsets are
    # multiples of 128), so the wrapper never transposes the output.
    for n in range(n_imgs):
        o_ref[n, :, :] = z[:, n * pix_per_img:(n + 1) * pix_per_img]


def conv3x3_bn_relu(x_nchw, weight_oihw, bias, gamma, beta, *, stride, padding, eps=1e-5):
    """Equivalent of CONV_3x3.forward (PyTorch NCHW in / NCHW out, BN in training mode).

    `bias` is accepted for API fidelity but is not fed to the kernel: under training-mode
    BatchNorm it is algebraically cancelled by the batch-mean subtraction.
    """
    del bias  # exactly absorbed by the BN mean subtraction
    N, Cin, H, W = x_nchw.shape
    Cout, _, KH, KW = weight_oihw.shape

    Hp, Wp = H + 2 * padding, W + 2 * padding
    OH = (Hp - KH) // stride + 1
    OW = (Wp - KW) // stride + 1
    OHW = OH * OW
    M = N * OHW
    K = KH * KW * Cin
    Kp = ((K + 15) // 16) * 16   # bf16 sublane packing: pad K to a multiple of 16

    # --- im2col-T in bf16 (layout plumbing only, done once in the wrapper) -------------
    # Pad + transpose the SMALL input once, then 9 slices + stack + contiguous reshape.
    xp = jnp.pad(x_nchw.astype(jnp.bfloat16),
                 ((0, 0), (0, 0), (padding, padding), (padding, padding)))
    xpt = jnp.transpose(xp, (1, 0, 2, 3))            # (Cin, N, Hp, Wp)  -- tiny transpose
    taps = []
    for kh in range(KH):
        for kw in range(KW):
            taps.append(jax.lax.slice(
                xpt, (0, 0, kh, kw),
                (Cin, N, kh + (OH - 1) * stride + 1, kw + (OW - 1) * stride + 1),
                (1, 1, stride, stride)))             # (Cin, N, OH, OW)
    # rows k = (kh*KW+kw)*Cin + ci ; cols m = n*OH*OW + oh*OW + ow  (contiguous reshape)
    p = jnp.stack(taps, axis=0).reshape(K, M)
    p = jnp.pad(p, ((0, Kp - K), (0, 0)))            # zero rows -> no effect on the matmul

    # weight (Cout, Cin, KH, KW) -> (Cout, KH, KW, Cin) -> (Cout, K) -> pad to (Cout, Kp)
    w2 = jnp.transpose(weight_oihw, (0, 2, 3, 1)).reshape(Cout, K).astype(jnp.bfloat16)
    w2 = jnp.pad(w2, ((0, 0), (0, Kp - K)))
    gb = jnp.stack([gamma.astype(jnp.float32), beta.astype(jnp.float32)], axis=1)  # (Cout, 2)

    kernel = functools.partial(_fused_conv_bn_relu_kernel,
                               n_imgs=N, pix_per_img=OHW, eps=eps)
    y = pl.pallas_call(
        kernel,
        out_shape=jax.ShapeDtypeStruct((N, Cout, OHW), jnp.float32),
        grid=(1,),
        in_specs=[
            pl.BlockSpec((Kp, M), lambda i: (0, 0)),
            pl.BlockSpec((Cout, Kp), lambda i: (0, 0)),
            pl.BlockSpec((Cout, 2), lambda i: (0, 0)),
        ],
        out_specs=pl.BlockSpec((N, Cout, OHW), lambda i: (0, 0, 0)),
        compiler_params=pltpu.CompilerParams(dimension_semantics=("arbitrary",)),
    )(p, w2, gb)

    # (N, Cout, OH*OW) -> (N, Cout, OH, OW): contiguous reshape, no transpose.
    return y.reshape(N, Cout, OH, OW)


def _reference(x_nchw, weight_oihw, bias, gamma, beta, *, stride, padding, eps=1e-5):
    conv = jax.lax.conv_general_dilated(
        x_nchw, weight_oihw,
        window_strides=(stride, stride),
        padding=[(padding, padding), (padding, padding)],
        dimension_numbers=("NCHW", "OIHW", "NCHW"),
    ) + bias.reshape(1, -1, 1, 1)
    mean = conv.mean(axis=(0, 2, 3), keepdims=True)
    var = ((conv - mean) ** 2).mean(axis=(0, 2, 3), keepdims=True)
    y = gamma.reshape(1, -1, 1, 1) * (conv - mean) * jax.lax.rsqrt(var + eps) \
        + beta.reshape(1, -1, 1, 1)
    return jnp.maximum(y, 0.0)


if __name__ == "__main__":
    # CONV_3x3(inplanes=4, outplanes=8, kernelsize=3, stride=1, padding=1, bias=True)
    N, Cin, H, W = 2, 4, 16, 16
    Cout, Ksz, stride, padding = 8, 3, 1, 1

    key = jax.random.PRNGKey(0)
    kx, kw, kb = jax.random.split(key, 3)
    x = jax.random.normal(kx, (N, Cin, H, W), dtype=jnp.float32)
    weight = jax.random.normal(kw, (Cout, Cin, Ksz, Ksz), dtype=jnp.float32) * 0.1
    bias = jax.random.normal(kb, (Cout,), dtype=jnp.float32) * 0.1
    gamma = jnp.ones((Cout,), dtype=jnp.float32)   # BatchNorm2d default init
    beta = jnp.zeros((Cout,), dtype=jnp.float32)

    out = conv3x3_bn_relu(x, weight, bias, gamma, beta, stride=stride, padding=padding)
    out = jax.block_until_ready(out)
    assert out.shape == (N, Cout, H, W)

    # (1) Tight check vs a reference that applies the same bf16 rounding to the conv
    #     inputs (all math in f32). The reference keeps the conv bias; the kernel drops
    #     it — training-mode BN cancels it exactly, so this also validates that identity.
    x_r = x.astype(jnp.bfloat16).astype(jnp.float32)
    w_r = weight.astype(jnp.bfloat16).astype(jnp.float32)
    ref_bf16_in = _reference(x_r, w_r, bias, gamma, beta, stride=stride, padding=padding)
    assert jnp.allclose(out, ref_bf16_in, atol=1e-3, rtol=1e-3), \
        "mismatch vs bf16-input reference"

    # (2) Semantic check vs the exact f32 module forward; tolerance loosened because the
    #     kernel feeds bf16 inputs to the MXU (f32 accumulation).
    ref = _reference(x, weight, bias, gamma, beta, stride=stride, padding=padding)
    assert jnp.allclose(out, ref, atol=5e-2, rtol=5e-2), \
        "mismatch vs f32 reference conv+bn+relu"

    print("KERNEL_OK")
</pallas_src>

<mosaic_0001>
module attributes {stable_mosaic.version = 11 : i64} {
  func.func @_fused_conv_bn_relu_kernel(%arg0: i32, %arg1: memref<48x512xbf16, #tpu.memory_space<vmem>>, %arg2: memref<8x48xbf16, #tpu.memory_space<vmem>>, %arg3: memref<8x2xf32, #tpu.memory_space<vmem>>, %arg4: memref<2x8x256xf32, #tpu.memory_space<vmem>>) attributes {dimension_semantics = [#tpu.dimension_semantics<arbitrary>], iteration_bounds = array<i64: 1>, scalar_prefetch = 0 : i64, scratch_operands = 0 : i64, tpu.core_type = #tpu.core_type<tc>, window_params = [{pipeline_mode = #tpu.pipeline_mode<synchronous>, transform_indices = @transform_0, window_bounds = array<i64: 48, 512>}, {pipeline_mode = #tpu.pipeline_mode<synchronous>, transform_indices = @transform_1, window_bounds = array<i64: 8, 48>}, {pipeline_mode = #tpu.pipeline_mode<synchronous>, transform_indices = @transform_2, window_bounds = array<i64: 8, 2>}, {pipeline_mode = #tpu.pipeline_mode<synchronous>, transform_indices = @transform_3, window_bounds = array<i64: 2, 8, 256>}]} {
    %c0 = arith.constant 0 : index
    %c0_0 = arith.constant 0 : index
    %0 = vector.load %arg2[%c0, %c0_0] : memref<8x48xbf16, #tpu.memory_space<vmem>>, vector<8x48xbf16>
    %c0_1 = arith.constant 0 : index
    %c0_2 = arith.constant 0 : index
    %1 = vector.load %arg1[%c0_1, %c0_2] : memref<48x512xbf16, #tpu.memory_space<vmem>>, vector<48x512xbf16>
    %cst = arith.constant dense<0.000000e+00> : vector<8x512xf32>
    %2 = tpu.matmul %0, %1, %cst {dimension_numbers = #tpu.dot_dimension_numbers<[1], [0], [0], [1], [0, 0, 1, 1], [], []>} : vector<8x48xbf16>, vector<48x512xbf16>, vector<8x512xf32> -> vector<8x512xf32>
    %cst_3 = arith.constant dense<0.000000e+00> : vector<8xf32>
    %3 = vector.multi_reduction <add>, %2, %cst_3 [1] : vector<8x512xf32> to vector<8xf32>
    %4 = vector.shape_cast %3 : vector<8xf32> to vector<8x1xf32>
    %5 = arith.mulf %2, %2 : vector<8x512xf32>
    %cst_4 = arith.constant dense<0.000000e+00> : vector<8xf32>
    %6 = vector.multi_reduction <add>, %5, %cst_4 [1] : vector<8x512xf32> to vector<8xf32>
    %7 = vector.shape_cast %6 : vector<8xf32> to vector<8x1xf32>
    %cst_5 = arith.constant 0.001953125 : f32
    %8 = vector.broadcast %cst_5 : f32 to vector<8x1xf32>
    %9 = arith.mulf %4, %8 : vector<8x1xf32>
    %cst_6 = arith.constant 0.001953125 : f32
    %10 = vector.broadcast %cst_6 : f32 to vector<8x1xf32>
    %11 = arith.mulf %7, %10 : vector<8x1xf32>
    %12 = arith.mulf %9, %9 : vector<8x1xf32>
    %13 = arith.subf %11, %12 : vector<8x1xf32>
    %c0_7 = arith.constant 0 : index
    %c0_8 = arith.constant 0 : index
    %14 = vector.load %arg3[%c0_7, %c0_8] : memref<8x2xf32, #tpu.memory_space<vmem>>, vector<8x1xf32>
    %c0_9 = arith.constant 0 : index
    %c1 = arith.constant 1 : index
    %15 = vector.load %arg3[%c0_9, %c1] : memref<8x2xf32, #tpu.memory_space<vmem>>, vector<8x1xf32>
    %cst_10 = arith.constant 9.99999974E-6 : f32
    %16 = vector.broadcast %cst_10 : f32 to vector<8x1xf32>
    %17 = arith.addf %13, %16 : vector<8x1xf32>
    %18 = math.rsqrt %17 : vector<8x1xf32>
    %19 = arith.mulf %14, %18 : vector<8x1xf32>
    %20 = arith.mulf %9, %19 : vector<8x1xf32>
    %21 = arith.subf %15, %20 : vector<8x1xf32>
    %22 = vector.broadcast %19 : vector<8x1xf32> to vector<8x512xf32>
    %23 = arith.mulf %2, %22 : vector<8x512xf32>
    %24 = vector.broadcast %21 : vector<8x1xf32> to vector<8x512xf32>
    %25 = arith.addf %23, %24 : vector<8x512xf32>
    %cst_11 = arith.constant 0.000000e+00 : f32
    %26 = vector.broadcast %cst_11 : f32 to vector<8x512xf32>
    %27 = arith.maximumf %25, %26 : vector<8x512xf32>
    %28 = vector.extract_strided_slice %27 {offsets = [0, 0], sizes = [8, 256], strides = [1, 1]} : vector<8x512xf32> to vector<8x256xf32>
    %c0_12 = arith.constant 0 : index
    %c0_13 = arith.constant 0 : index
    %c0_14 = arith.constant 0 : index
    %29 = vector.load %arg4[%c0_12, %c0_13, %c0_14] : memref<2x8x256xf32, #tpu.memory_space<vmem>>, vector<1x8x256xf32>
    %30 = vector.shape_cast %29 : vector<1x8x256xf32> to vector<8x256xf32>
    %31 = vector.shape_cast %28 : vector<8x256xf32> to vector<1x8x256xf32>
    tpu.vector_store %arg4[%c0_12, %c0_13, %c0_14], %31 {strides = array<i32>} : memref<2x8x256xf32, #tpu.memory_space<vmem>>, vector<1x8x256xf32>,
    %32 = vector.extract_strided_slice %27 {offsets = [0, 256], sizes = [8, 256], strides = [1, 1]} : vector<8x512xf32> to vector<8x256xf32>
    %c1_15 = arith.constant 1 : index
    %c0_16 = arith.constant 0 : index
    %c0_17 = arith.constant 0 : index
    %33 = vector.load %arg4[%c1_15, %c0_16, %c0_17] : memref<2x8x256xf32, #tpu.memory_space<vmem>>, vector<1x8x256xf32>
    %34 = vector.shape_cast %33 : vector<1x8x256xf32> to vector<8x256xf32>
    %35 = vector.shape_cast %32 : vector<8x256xf32> to vector<1x8x256xf32>
    tpu.vector_store %arg4[%c1_15, %c0_16, %c0_17], %35 {strides = array<i32>} : memref<2x8x256xf32, #tpu.memory_space<vmem>>, vector<1x8x256xf32>,
    return
  }
  func.func @transform_0(%arg0: i32) -> (i32, i32) {
    %c0_i32 = arith.constant 0 : i32
    %c0_i32_0 = arith.constant 0 : i32
    %c0_i32_1 = arith.constant 0 : i32
    return %c0_i32, %c0_i32_0 : i32, i32
  }
  func.func @transform_1(%arg0: i32) -> (i32, i32) {
    %c0_i32 = arith.constant 0 : i32
    %c0_i32_0 = arith.constant 0 : i32
    %c0_i32_1 = arith.constant 0 : i32
    return %c0_i32, %c0_i32_0 : i32, i32
  }
  func.func @transform_2(%arg0: i32) -> (i32, i32) {
    %c0_i32 = arith.constant 0 : i32
    %c0_i32_0 = arith.constant 0 : i32
    %c0_i32_1 = arith.constant 0 : i32
    return %c0_i32, %c0_i32_0 : i32, i32
  }
  func.func @transform_3(%arg0: i32) -> (i32, i32, i32) {
    %c0_i32 = arith.constant 0 : i32
    %c0_i32_0 = arith.constant 0 : i32
    %c0_i32_1 = arith.constant 0 : i32
    %c0_i32_2 = arith.constant 0 : i32
    return %c0_i32, %c0_i32_0, %c0_i32_1 : i32, i32, i32
  }
}

</mosaic_0001>

<llo_original>
// kernel: tpu_custom_call.1
$region0: #{tpu_custom_call.1}
  #allocation0 [shape = 'u32[]', space=smem, size = 0x4, offset = 0x4, fixed_abs, tag = 'smem constant byte address 0x4 - core index']
  #allocation1 [shape = 'u32[72,128]{1,0:T(1,128)}', space=vmem, size = 0x9000, scoped, tag = 'internal scratch']
  %s0 = inlined_call_operand.hbm [shape: bf16[48,512], index: 0, kind: input, shape index: {}]
  %s1 = inlined_call_operand.vmem [shape: bf16[8,48], index: 1, kind: input, shape index: {}]
  %s2 = inlined_call_operand.vmem [shape: f32[8,2], index: 2, kind: input, shape index: {}]
  %s3 = inlined_call_operand.hbm [shape: f32[2,8,256], index: 3, kind: output, shape index: {}]
  %s4 = sld [smem:[#allocation0]]
  $region26: #{tpu_custom_call.1} parent=0
    _
  %s6 = ssub.s32 1, %s4
  %s7 = scalar_select 0, %s6, %s4
  $region1: #{tpu_custom_call.1} parent=0
    #allocation2 [shape = 'u8[49152]{0}', space=vmem, size = 0xc000, scoped, tag = 'input window, operand 0, single buffered']
    #allocation3 [shape = 's32[1]{0}', space=sflag, size = 0x4, scoped, tag = 'scoped memory for tpu_custom_call.1']
    #allocation4 [shape = 's32[1]{0}', space=sflag, size = 0x4, scoped, tag = 'scoped memory for tpu_custom_call.1']
    #allocation5 [shape = 'u8[16384]{0}', space=vmem, size = 0x4000, scoped, tag = 'output window, operand 0, single buffered']
    %8 = vsyncpa [#allocation3], 0
    %9 = vsyncpa [#allocation4], 0
    // Predicated region
    $region2: #{tpu_custom_call.1} parent=1 // pred_check
      _
    $region3: #{tpu_custom_call.1} parent=1 // pred_check_branch
      %11 = sbr.rel (0) target = $region5
    $region4: #{tpu_custom_call.1} parent=1 // pred_region
      %13 = vsyncadd [#allocation3], 0
      %s14 = sshll.u32 %s0, 4
      %s15 = int_to_ptr.hbm [resolvable:$true] %s14
      %s16 = sshll.u32 [#allocation2], 4
      %s17 = int_to_ptr.vmem [resolvable:$true] %s16
      %22 = dma.hbm_to_vmem [thread:$0]  %s15, 1536, %s17, [#allocation3], 256, 256, 16
    $region5: #{tpu_custom_call.1} parent=1 // pred_fallthru
      _
    // Predicated region
    $region6: #{tpu_custom_call.1} parent=1 // pred_check
      _
    $region7: #{tpu_custom_call.1} parent=1 // pred_check_branch
      %24 = sbr.rel (0) target = $region9
    $region8: #{tpu_custom_call.1} parent=1 // pred_region
      _
    $region9: #{tpu_custom_call.1} parent=1 // pred_fallthru
      _
    // Predicated region
    $region10: #{tpu_custom_call.1} parent=1 // pred_check
      _
    $region11: #{tpu_custom_call.1} parent=1 // pred_check_branch
      %26 = sbr.rel (0) target = $region13
    $region12: #{tpu_custom_call.1} parent=1 // pred_region
      _
    $region13: #{tpu_custom_call.1} parent=1 // pred_fallthru
      _
    // Predicated region
    $region14: #{tpu_custom_call.1} parent=1 // pred_check
      _
    $region15: #{tpu_custom_call.1} parent=1 // pred_check_branch
      %28 = sbr.rel (0) target = $region17
    $region16: #{tpu_custom_call.1} parent=1 // pred_region
      %30 = dma.done [#allocation3], 1536
    $region17: #{tpu_custom_call.1} parent=1 // pred_fallthru
      _
    %v32 = vld [vmem:[%s1] sm:$0xf]
    %v33 = vld [vmem:[#allocation2] sm:$0xff]
    %v34 = vld [vmem:[#allocation2 + $0x8] sm:$0xff]
    %v35 = vld [vmem:[#allocation2 + $0x10] sm:$0xff]
    %v36 = vld [vmem:[#allocation2 + $0x18] sm:$0xff]
    %v37 = vld [vmem:[#allocation2 + $0x20] sm:$0xff]
    %v38 = vld [vmem:[#allocation2 + $0x28] sm:$0xff]
    %v39 = vld [vmem:[#allocation2 + $0x30] sm:$0xff]
    %v40 = vld [vmem:[#allocation2 + $0x38] sm:$0xff]
    %v41 = vld [vmem:[#allocation2 + $0x40] sm:$0xff]
    %v42 = vld [vmem:[#allocation2 + $0x48] sm:$0xff]
    %v43 = vld [vmem:[#allocation2 + $0x50] sm:$0xff]
    %v44 = vld [vmem:[#allocation2 + $0x58] sm:$0xff]
    %v57 = vunpack.c.l.b16 %v33
    %v58 = vunpack.c.h.b16 %v33
    %v59 = vunpack.c.l.b16 %v34
    %v60 = vunpack.c.h.b16 %v34
    %v61 = vunpack.c.l.b16 %v35
    %v62 = vunpack.c.h.b16 %v35
    %v63 = vunpack.c.l.b16 %v36
    %v64 = vunpack.c.h.b16 %v36
    %v65 = vunpack.c.l.b16 %v37
    %v66 = vunpack.c.h.b16 %v37
    %v67 = vunpack.c.l.b16 %v38
    %v68 = vunpack.c.h.b16 %v38
    %v69 = vunpack.c.l.b16 %v39
    %v70 = vunpack.c.h.b16 %v39
    %v71 = vunpack.c.l.b16 %v40
    %v72 = vunpack.c.h.b16 %v40
    %v73 = vunpack.c.l.b16 %v41
    %v74 = vunpack.c.h.b16 %v41
    %v75 = vunpack.c.l.b16 %v42
    %v76 = vunpack.c.h.b16 %v42
    %v77 = vunpack.c.l.b16 %v43
    %v78 = vunpack.c.h.b16 %v43
    %v79 = vunpack.c.l.b16 %v44
    %v80 = vunpack.c.h.b16 %v44
    %v81 = vpack.c.b16 %v61, %v57
    %v82 = vpack.c.b16 %v62, %v58
    %v83 = vpack.c.b16 %v63, %v59
    %v84 = vpack.c.b16 %v64, %v60
    %v85 = vpack.c.b16 %v69, %v65
    %v86 = vpack.c.b16 %v70, %v66
    %v87 = vpack.c.b16 %v71, %v67
    %v88 = vpack.c.b16 %v72, %v68
    %v89 = vpack.c.b16 %v77, %v73
    %v90 = vpack.c.b16 %v78, %v74
    %v91 = vpack.c.b16 %v79, %v75
    %v92 = vpack.c.b16 %v80, %v76
    %vm105 = vcmask 392192
    %v107 = vsel %vm105, %v32, 0
    %109 = vmatpush.bf16.msra.mxu0 0
    %110 = vmatpush.bf16.msra.mxu0 0
    %111 = vmatpush.bf16.msra.mxu0 0
    %112 = vmatpush.bf16.msra.mxu0 0
    %113 = vmatpush.bf16.msra.mxu0 0
    %114 = vmatpush.bf16.msra.mxu0 %v89
    %115 = vmatpush.bf16.msra.mxu0 %v85
    %116 = vmatpush.bf16.msra.mxu0 %v81
    %117 = vmatmul.bf16.gmra.mxu0 %v107
    %v118 = vpop.f32.mrf.mxu0
    %v119 = vadd.f32 0.0, %v118
    %v120 = vpop.f32.mrf.mxu0
    %121 = vdwg.mxu0
    %122 = vmatpush.bf16.msra.mxu0 0
    %123 = vmatpush.bf16.msra.mxu0 0
    %124 = vmatpush.bf16.msra.mxu0 0
    %125 = vmatpush.bf16.msra.mxu0 0
    %126 = vmatpush.bf16.msra.mxu0 0
    %127 = vmatpush.bf16.msra.mxu0 %v90
    %128 = vmatpush.bf16.msra.mxu0 %v86
    %129 = vmatpush.bf16.msra.mxu0 %v82
    %130 = vmatmul.bf16.gmra.mxu0 %v107
    %v131 = vpop.f32.mrf.mxu0
    %v132 = vadd.f32 0.0, %v131
    %v133 = vpop.f32.mrf.mxu0
    %134 = vdwg.mxu0
    %135 = vmatpush.bf16.msra.mxu0 0
    %136 = vmatpush.bf16.msra.mxu0 0
    %137 = vmatpush.bf16.msra.mxu0 0
    %138 = vmatpush.bf16.msra.mxu0 0
    %139 = vmatpush.bf16.msra.mxu0 0
    %140 = vmatpush.bf16.msra.mxu0 %v91
    %141 = vmatpush.bf16.msra.mxu0 %v87
    %142 = vmatpush.bf16.msra.mxu0 %v83
    %143 = vmatmul.bf16.gmra.mxu0 %v107
    %v144 = vpop.f32.mrf.mxu0
    %v145 = vadd.f32 0.0, %v144
    %v146 = vpop.f32.mrf.mxu0
    %147 = vdwg.mxu0
    %148 = vmatpush.bf16.msra.mxu0 0
    %149 = vmatpush.bf16.msra.mxu0 0
    %150 = vmatpush.bf16.msra.mxu0 0
    %151 = vmatpush.bf16.msra.mxu0 0
    %152 = vmatpush.bf16.msra.mxu0 0
    %153 = vmatpush.bf16.msra.mxu0 %v92
    %154 = vmatpush.bf16.msra.mxu0 %v88
    %155 = vmatpush.bf16.msra.mxu0 %v84
    %156 = vmatmul.bf16.gmra.mxu0 %v107
    %v157 = vpop.f32.mrf.mxu0
    %v158 = vadd.f32 0.0, %v157
    %v159 = vpop.f32.mrf.mxu0
    %160 = vdwg.mxu0
    %v161 = vadd.f32 %v119, %v132
    %v162 = vadd.f32 %v161, %v145
    %v163 = vadd.f32 %v162, %v158
    %164 = vadd.xlane.f32.xlu0 %v163
    %v165 = vpop.xlane.xlu0 %164
    %v166 = vmul.f32 %v119, %v119
    %v167 = vmul.f32 %v132, %v132
    %v168 = vmul.f32 %v145, %v145
    %v169 = vmul.f32 %v158, %v158
    %v170 = vadd.f32 %v166, %v167
    %v171 = vadd.f32 %v170, %v168
    %v172 = vadd.f32 %v171, %v169
    %173 = vadd.xlane.f32.xlu0 %v172
    %v174 = vpop.xlane.xlu0 %173
    %v175 = vmul.f32 %v165, 0.001953125
    %v176 = vmul.f32 %v174, 0.001953125
    %v177 = vmul.f32 %v175, %v175
    %v178 = vsub.f32 %v176, %v177
    %v179 = vld [vmem:[%s2] sm:$0xff]
    %v180 = vadd.f32 %v178, 1e-05
    %v181 = vrsqrt.pop %v180
    %v182 = vmul.f32 %v181, %v180
    %v183 = vmul.f32 %v182, %v181
    %v184 = vmul.f32 0.5, %v183
    %v185 = vsub.f32 1.5, %v184
    %v186 = vmul.f32 %v181, %v185
    %vm187 = vweird.f32 %v180
    %vm188 = vweird.f32 %v181
    %vm189 = vmor %vm187, %vm188
    %v190 = vsel %vm189, %v181, %v186
    %v191 = vmul.f32 %v179, %v190
    %v192 = vmul.f32 %v175, %v191
    %194 = vrot.lane.b32.xlu0 %v192, 1
    %v195 = vpop.permute.xlu0 %194
    %v197 = vsub.f32 %v179, %v195
    %199 = vset.pattern.permute.xlu0 0
    %200 = vperm.xlu0 %199, %v191
    %v201 = vpop.permute.xlu0 %200
    %v203 = vmul.f32 %v119, %v201
    %v204 = vmul.f32 %v132, %v201
    %v205 = vmul.f32 %v145, %v201
    %v206 = vmul.f32 %v158, %v201
    %208 = vset.pattern.permute.xlu0 1
    %209 = vperm.xlu0 %208, %v197
    %v210 = vpop.permute.xlu0 %209
    %v212 = vadd.f32 %v203, %v210
    %v213 = vadd.f32 %v204, %v210
    %v214 = vadd.f32 %v205, %v210
    %v215 = vadd.f32 %v206, %v210
    %v216 = vmax.f32 %v212, 0.0
    %v217 = vmax.f32 %v213, 0.0
    %v218 = vmax.f32 %v214, 0.0
    %v219 = vmax.f32 %v215, 0.0
    %220 = vst [vmem:[#allocation5] sm:$0xff] %v216
    %221 = vst [vmem:[#allocation5 + $0x8] sm:$0xff] %v217
    %s222 = scalar_lea.vmem [#allocation5], 16
    %223 = vst [vmem:[%s222] sm:$0xff] %v218
    %224 = vst [vmem:[%s222 + $0x8] sm:$0xff] %v219
    // Predicated region
    $region18: #{tpu_custom_call.1} parent=1 // pred_check
      _
    $region19: #{tpu_custom_call.1} parent=1 // pred_check_branch
      %226 = sbr.rel (0) target = $region21
    $region20: #{tpu_custom_call.1} parent=1 // pred_region
      %228 = vsyncadd [#allocation4], 0
      %s229 = sshll.u32 [#allocation5], 4
      %s230 = int_to_ptr.vmem [resolvable:$true] %s229
      %s231 = sshll.u32 %s3, 4
      %s232 = int_to_ptr.hbm [resolvable:$true] %s231
      %237 = dma.vmem_to_hbm [thread:$0]  %s230, 512, %s232, [#allocation4], 256, 256, 16
    $region21: #{tpu_custom_call.1} parent=1 // pred_fallthru
      _
    // Predicated region
    $region22: #{tpu_custom_call.1} parent=1 // pred_check
      _
    $region23: #{tpu_custom_call.1} parent=1 // pred_check_branch
      %239 = sbr.rel (0) target = $region25
    $region24: #{tpu_custom_call.1} parent=1 // pred_region
      %241 = dma.done [#allocation4], 512
    $region25: #{tpu_custom_call.1} parent=1 // pred_fallthru
      _
    %242 = vsyncpa [#allocation3], 1
    %243 = vsyncpa [#allocation4], 1

</llo_original>
